<compile_context>
chip_gen: v6e
topology: v6e:2x2x1
jax: 0.10.0
libtpu: 0.0.40
codegen_flags: <defaults>
</compile_context>

<pallas_src>
import functools

import jax
import jax.numpy as jnp
import numpy as np
from jax import lax
from jax.experimental import pallas as pl
from jax.experimental.pallas import tpu as pltpu

ATT_NEG_SLOPE = 0.2    # GATConv attention leaky_relu slope (PyG default)
ACT_NEG_SLOPE = 0.01   # F.leaky_relu default slope (GNN.act)
LANE = 128             # output-feature axes padded to one full vreg lane width
NEG_INF = -1e30


def _leaky(x, slope):
    return jnp.where(x > 0, x, slope * x)


def _bf16(x):
    return x.astype(jnp.bfloat16)


def _round_up(n, m):
    return -(-n // m) * m


# ----------------------------------------------------------------------------
# Fused Pallas kernel
# ----------------------------------------------------------------------------
def _gat_layer(x, w_aug, a_src, bias, adj_bias, f_out, *, apply_act):
    """One GAT layer (heads=1) on values resident in VMEM / vregs.

    w_aug is the bf16 weight padded to 128 lanes with column `f_out` holding
    W @ a_dst^T, so e_dst is harvested from the x@W MXU pass for free.
    """
    # h_aug = x @ W_aug : bf16 MXU inputs, f32 accumulation.  (N, 128)
    h_aug = jnp.dot(_bf16(x), w_aug, preferred_element_type=jnp.float32)

    # e_dst[i] = <h[i], a_dst>  == column f_out of the augmented matmul.
    e_dst = h_aug[:, f_out:f_out + 1]                                    # (N,1)
    # e_src as a row: contract the feature axis of a_src with the feature axis
    # of h (no h.T materialization).  bf16 operands -> single MXU pass.
    e_src_row = lax.dot_general(a_src, _bf16(h_aug),
                                (((1,), (1,)), ((), ())),
                                preferred_element_type=jnp.float32)      # (1,N)

    # Masked softmax over incoming edges via additive bias (0 / -1e30).
    # Self-loops guarantee >=1 unmasked entry per row, so exp(-1e30 - max)
    # underflows to exactly 0 and no post-exp re-mask is needed.
    raw = _leaky(e_dst + e_src_row, ATT_NEG_SLOPE) + adj_bias            # f32
    raw = raw - jnp.max(raw, axis=1, keepdims=True)
    p = jnp.exp(raw)
    alpha = p * pl.reciprocal(jnp.sum(p, axis=1, keepdims=True), approx=True)

    # Aggregate: alpha @ h (+ bias).  Garbage in lane f_out (the e_dst column)
    # is harmless: downstream weights / the final slice never read it.
    out = jnp.dot(_bf16(alpha), h_aug.astype(jnp.bfloat16),
                  preferred_element_type=jnp.float32) + bias
    if apply_act:
        out = _leaky(out, ACT_NEG_SLOPE)   # GNN.act (F.leaky_relu)
    return out


def make_gnn_kernel(hid_dim, out_dim):
    def kernel(x_ref, adj_bias_ref, pool_ref,
               w1_ref, a1s_ref, b1_ref,
               w2_ref, a2s_ref, b2_ref,
               out_ref):
        """conv1 -> leaky_relu -> (dropout=id) -> conv2 -> global_mean_pool."""
        # bf16 bias on the wire (half DMA of the dominant O(N^2) input),
        # upcast once so the logits stay f32.
        adj_bias = adj_bias_ref[...].astype(jnp.float32)

        h = _gat_layer(x_ref[...], w1_ref[...], a1s_ref[...], b1_ref[...],
                       adj_bias, hid_dim, apply_act=True)
        # TODO(synk): F.dropout(training=True) is stochastic; treated as
        # identity (eval-mode semantics).
        h = _gat_layer(h, w2_ref[...], a2s_ref[...], b2_ref[...],
                       adj_bias, out_dim, apply_act=False)

        # global_mean_pool: rows of pool_ref are already scaled by 1/count.
        # TODO(synk): for large graphs (N ~ >1k, esp. v7x 64 MiB VMEM), row-tile
        # the dst axis with an online softmax, mark it "parallel" for the two
        # TensorCores, set vmem_limit_bytes, and replace the dense one-hot
        # matmul with a scalar-prefetch-driven segment sum.
        out_ref[...] = jnp.dot(pool_ref[...], _bf16(h),
                               preferred_element_type=jnp.float32)
    return kernel


# ----------------------------------------------------------------------------
# Host-side parameter preparation (done ONCE at init, off the hot path)
# ----------------------------------------------------------------------------
def prepare_layer_params(p, f_in_pad, f_out):
    """Pad + augment one GAT layer's parameters.

    Returns (w_aug_bf16 [f_in_pad, 128], a_src_bf16 [1, 128], bias_f32 [1,128]).
    Column `f_out` of w_aug holds W @ a_dst^T so e_dst comes out of x@W free.
    """
    w = np.asarray(p["w"], np.float32)
    a_src = np.asarray(p["a_src"], np.float32)
    a_dst = np.asarray(p["a_dst"], np.float32)
    bias = np.asarray(p["bias"], np.float32)
    f_in = w.shape[0]
    assert f_in <= f_in_pad and f_out + 1 <= LANE

    w_aug = np.zeros((f_in_pad, LANE), np.float32)
    w_aug[:f_in, :f_out] = w
    w_aug[:f_in, f_out] = (w @ a_dst.T)[:, 0]

    a_src_pad = np.zeros((1, LANE), np.float32)
    a_src_pad[0, :f_out] = a_src[0]
    bias_pad = np.zeros((1, LANE), np.float32)
    bias_pad[0, :f_out] = bias[0]

    return (jnp.asarray(w_aug, dtype=jnp.bfloat16),
            jnp.asarray(a_src_pad, dtype=jnp.bfloat16),
            jnp.asarray(bias_pad, dtype=jnp.float32))


# ----------------------------------------------------------------------------
# Jitted wrapper: one dispatch = padding + bias build + fused kernel + slice
# ----------------------------------------------------------------------------
@functools.partial(jax.jit, static_argnames=("hid_dim", "out_dim"))
def gnn_forward(x, adj, onehot, inv_counts, layer1, layer2, *, hid_dim, out_dim):
    w1, a1s, b1 = layer1
    w2, a2s, b2 = layer2
    N = x.shape[0]
    G = onehot.shape[0]
    k1_pad = w1.shape[0]

    # Pad only the contraction axis of x to the bf16 sublane tile (16), not 128.
    x_pad = jnp.zeros((N, k1_pad), x.dtype).at[:, :x.shape[1]].set(x)
    # Additive attention bias replaces per-layer compare + select.
    adj_bias = jnp.where(adj != 0, 0.0, NEG_INF).astype(jnp.bfloat16)
    # Fold 1/count into the pooling one-hot.
    pool_mat = (onehot * inv_counts).astype(jnp.bfloat16)

    out = pl.pallas_call(
        make_gnn_kernel(hid_dim, out_dim),
        out_shape=jax.ShapeDtypeStruct((G, LANE), jnp.float32),
        in_specs=[pl.BlockSpec(memory_space=pltpu.MemorySpace.VMEM)] * 9,
        out_specs=pl.BlockSpec(memory_space=pltpu.MemorySpace.VMEM),
    )(x_pad, adj_bias, pool_mat, w1, a1s, b1, w2, a2s, b2)
    return out[:, :out_dim]


# ----------------------------------------------------------------------------
# Pure-JAX reference (same bf16-matmul / f32-accumulate precision regime)
# ----------------------------------------------------------------------------
def _bf16_dot(a, b):
    return jnp.dot(a.astype(jnp.bfloat16), b.astype(jnp.bfloat16),
                   preferred_element_type=jnp.float32)


def _gat_ref(x, w, a_src, a_dst, bias, adj, apply_act):
    h = _bf16_dot(x, w)
    e_dst = (h * a_dst).sum(1, keepdims=True)
    e_src = (h * a_src).sum(1, keepdims=True)
    raw = _leaky(e_dst + e_src.T, ATT_NEG_SLOPE)
    raw = jnp.where(adj != 0, raw, -jnp.inf)
    alpha = jax.nn.softmax(raw, axis=1)
    out = _bf16_dot(alpha, h) + bias
    if apply_act:
        out = _leaky(out, ACT_NEG_SLOPE)
    return out


def _gnn_ref(x, adj, onehot, inv_counts, params):
    h = x
    for li, p in enumerate(params):
        h = _gat_ref(h, p["w"], p["a_src"], p["a_dst"], p["bias"], adj,
                     apply_act=(li != len(params) - 1))
    return _bf16_dot(onehot, h) * inv_counts


# ----------------------------------------------------------------------------
# Main
# ----------------------------------------------------------------------------
if __name__ == "__main__":
    # Small deterministic problem: 2 graphs x 8 nodes each.
    N = 16           # total nodes
    G = 2            # graphs
    INPUT_DIM = 8
    HID_DIM = 32
    OUT_DIM = 16

    key = jax.random.PRNGKey(0)
    k_x, k0w, k0s, k0d, k0b, k1w, k1s, k1d, k1b = jax.random.split(key, 9)

    # node features
    x = jax.random.normal(k_x, (N, INPUT_DIM), dtype=jnp.float32)

    # edge_index: directed ring (both directions) inside each graph
    src, dst = [], []
    for g in range(G):
        base = g * 8
        for i in range(8):
            a, b = base + i, base + (i + 1) % 8
            src += [a, b]
            dst += [b, a]
    edge_index = np.stack([np.array(src), np.array(dst)])   # (2, 32)

    # dense adjacency A[i, j] = 1 iff edge j -> i ; add self-loops
    adj_np = np.zeros((N, N), dtype=np.float32)
    adj_np[edge_index[1], edge_index[0]] = 1.0
    adj_np[np.arange(N), np.arange(N)] = 1.0
    adj = jnp.asarray(adj_np)

    # batch vector -> one-hot (G, N) + inverse counts for mean pooling
    batch = np.array([0] * 8 + [1] * 8, dtype=np.int32)
    onehot_np = np.zeros((G, N), dtype=np.float32)
    onehot_np[batch, np.arange(N)] = 1.0
    onehot = jnp.asarray(onehot_np)
    inv_counts = jnp.asarray(1.0 / onehot_np.sum(axis=1, keepdims=True))

    # deterministic GATConv parameters (heads=1): W (Fin,Fout), att (1,Fout),
    # bias (1,Fout)
    def init_layer(kw, ks, kd, kb, f_in, f_out):
        return {
            "w": 0.2 * jax.random.normal(kw, (f_in, f_out), dtype=jnp.float32),
            "a_src": 0.2 * jax.random.normal(ks, (1, f_out), dtype=jnp.float32),
            "a_dst": 0.2 * jax.random.normal(kd, (1, f_out), dtype=jnp.float32),
            "bias": 0.1 * jax.random.normal(kb, (1, f_out), dtype=jnp.float32),
        }

    params = [
        init_layer(k0w, k0s, k0d, k0b, INPUT_DIM, HID_DIM),
        init_layer(k1w, k1s, k1d, k1b, HID_DIM, OUT_DIM),
    ]

    # Static parameter padding / augmentation: done once, off the hot path.
    layer1 = prepare_layer_params(params[0], _round_up(INPUT_DIM, 16), HID_DIM)
    layer2 = prepare_layer_params(params[1], LANE, OUT_DIM)

    graph_emb = gnn_forward(x, adj, onehot, inv_counts, layer1, layer2,
                            hid_dim=HID_DIM, out_dim=OUT_DIM)
    graph_emb = jax.block_until_ready(graph_emb)

    ref = _gnn_ref(x, adj, onehot, inv_counts, params)
    assert graph_emb.shape == (G, OUT_DIM)
    # bf16 MXU operands (kernel and reference), the folded W@a_dst column and
    # the approx-reciprocal softmax denominator: compare at 2e-2.
    assert bool(jnp.allclose(graph_emb, ref, atol=2e-2, rtol=2e-2)), \
        "Pallas GNN output mismatch vs reference"

    print("KERNEL_OK")
</pallas_src>

<mosaic_0001>
module attributes {stable_mosaic.version = 11 : i64} {
  func.func @kernel(%arg0: memref<16x16xf32, #tpu.memory_space<vmem>>, %arg1: memref<16x16xbf16, #tpu.memory_space<vmem>>, %arg2: memref<2x16xbf16, #tpu.memory_space<vmem>>, %arg3: memref<16x128xbf16, #tpu.memory_space<vmem>>, %arg4: memref<1x128xbf16, #tpu.memory_space<vmem>>, %arg5: memref<1x128xf32, #tpu.memory_space<vmem>>, %arg6: memref<128x128xbf16, #tpu.memory_space<vmem>>, %arg7: memref<1x128xbf16, #tpu.memory_space<vmem>>, %arg8: memref<1x128xf32, #tpu.memory_space<vmem>>, %arg9: memref<2x128xf32, #tpu.memory_space<vmem>>) attributes {dimension_semantics = [], scalar_prefetch = 0 : i64, scratch_operands = 0 : i64, tpu.core_type = #tpu.core_type<tc>} {
    %c0 = arith.constant 0 : index
    %c0_0 = arith.constant 0 : index
    %0 = vector.load %arg1[%c0, %c0_0] : memref<16x16xbf16, #tpu.memory_space<vmem>>, vector<16x16xbf16>
    %1 = arith.extf %0 : vector<16x16xbf16> to vector<16x16xf32>
    %c0_1 = arith.constant 0 : index
    %c0_2 = arith.constant 0 : index
    %2 = vector.load %arg0[%c0_1, %c0_2] : memref<16x16xf32, #tpu.memory_space<vmem>>, vector<16x16xf32>
    %c0_3 = arith.constant 0 : index
    %c0_4 = arith.constant 0 : index
    %3 = vector.load %arg3[%c0_3, %c0_4] : memref<16x128xbf16, #tpu.memory_space<vmem>>, vector<16x128xbf16>
    %c0_5 = arith.constant 0 : index
    %c0_6 = arith.constant 0 : index
    %4 = vector.load %arg4[%c0_5, %c0_6] : memref<1x128xbf16, #tpu.memory_space<vmem>>, vector<1x128xbf16>
    %c0_7 = arith.constant 0 : index
    %c0_8 = arith.constant 0 : index
    %5 = vector.load %arg5[%c0_7, %c0_8] : memref<1x128xf32, #tpu.memory_space<vmem>>, vector<1x128xf32>
    %6 = arith.truncf %2 : vector<16x16xf32> to vector<16x16xbf16>
    %cst = arith.constant dense<0.000000e+00> : vector<16x128xf32>
    %7 = tpu.matmul %6, %3, %cst {dimension_numbers = #tpu.dot_dimension_numbers<[1], [0], [0], [1], [0, 0, 1, 1], [], []>} : vector<16x16xbf16>, vector<16x128xbf16>, vector<16x128xf32> -> vector<16x128xf32>
    %8 = vector.extract_strided_slice %7 {offsets = [0, 32], sizes = [16, 1], strides = [1, 1]} : vector<16x128xf32> to vector<16x1xf32>
    %9 = arith.truncf %7 : vector<16x128xf32> to vector<16x128xbf16>
    %cst_9 = arith.constant dense<0.000000e+00> : vector<1x16xf32>
    %10 = tpu.matmul %4, %9, %cst_9 {dimension_numbers = #tpu.dot_dimension_numbers<[1], [1], [0], [0], [0, 0, 1, 0], [], []>} : vector<1x128xbf16>, vector<16x128xbf16>, vector<1x16xf32> -> vector<1x16xf32>
    %11 = vector.broadcast %8 : vector<16x1xf32> to vector<16x16xf32>
    %12 = vector.broadcast %10 : vector<1x16xf32> to vector<16x16xf32>
    %13 = arith.addf %11, %12 : vector<16x16xf32>
    %cst_10 = arith.constant 0.000000e+00 : f32
    %14 = vector.broadcast %cst_10 : f32 to vector<16x16xf32>
    %15 = arith.cmpf ogt, %13, %14 : vector<16x16xf32>
    %cst_11 = arith.constant 2.000000e-01 : f32
    %16 = vector.broadcast %cst_11 : f32 to vector<16x16xf32>
    %17 = arith.mulf %16, %13 : vector<16x16xf32>
    %18 = arith.select %15, %13, %17 : vector<16x16xi1>, vector<16x16xf32>
    %19 = arith.addf %18, %1 : vector<16x16xf32>
    %cst_12 = arith.constant dense<0xFF800000> : vector<16xf32>
    %20 = vector.multi_reduction <maximumf>, %19, %cst_12 [1] : vector<16x16xf32> to vector<16xf32>
    %21 = vector.shape_cast %20 : vector<16xf32> to vector<16x1xf32>
    %22 = vector.broadcast %21 : vector<16x1xf32> to vector<16x16xf32>
    %23 = arith.subf %19, %22 : vector<16x16xf32>
    %24 = math.exp %23 : vector<16x16xf32>
    %cst_13 = arith.constant dense<0.000000e+00> : vector<16xf32>
    %25 = vector.multi_reduction <add>, %24, %cst_13 [1] : vector<16x16xf32> to vector<16xf32>
    %26 = vector.shape_cast %25 : vector<16xf32> to vector<16x1xf32>
    %27 = tpu.reciprocal %26 {approx = true} : vector<16x1xf32> -> vector<16x1xf32>
    %28 = vector.broadcast %27 : vector<16x1xf32> to vector<16x16xf32>
    %29 = arith.mulf %24, %28 : vector<16x16xf32>
    %30 = arith.truncf %29 : vector<16x16xf32> to vector<16x16xbf16>
    %31 = arith.truncf %7 : vector<16x128xf32> to vector<16x128xbf16>
    %cst_14 = arith.constant dense<0.000000e+00> : vector<16x128xf32>
    %32 = tpu.matmul %30, %31, %cst_14 {dimension_numbers = #tpu.dot_dimension_numbers<[1], [0], [0], [1], [0, 0, 1, 1], [], []>} : vector<16x16xbf16>, vector<16x128xbf16>, vector<16x128xf32> -> vector<16x128xf32>
    %33 = vector.broadcast %5 : vector<1x128xf32> to vector<16x128xf32>
    %34 = arith.addf %32, %33 : vector<16x128xf32>
    %cst_15 = arith.constant 0.000000e+00 : f32
    %35 = vector.broadcast %cst_15 : f32 to vector<16x128xf32>
    %36 = arith.cmpf ogt, %34, %35 : vector<16x128xf32>
    %cst_16 = arith.constant 0.00999999977 : f32
    %37 = vector.broadcast %cst_16 : f32 to vector<16x128xf32>
    %38 = arith.mulf %37, %34 : vector<16x128xf32>
    %39 = arith.select %36, %34, %38 : vector<16x128xi1>, vector<16x128xf32>
    %c0_17 = arith.constant 0 : index
    %c0_18 = arith.constant 0 : index
    %40 = vector.load %arg6[%c0_17, %c0_18] : memref<128x128xbf16, #tpu.memory_space<vmem>>, vector<128x128xbf16>
    %c0_19 = arith.constant 0 : index
    %c0_20 = arith.constant 0 : index
    %41 = vector.load %arg7[%c0_19, %c0_20] : memref<1x128xbf16, #tpu.memory_space<vmem>>, vector<1x128xbf16>
    %c0_21 = arith.constant 0 : index
    %c0_22 = arith.constant 0 : index
    %42 = vector.load %arg8[%c0_21, %c0_22] : memref<1x128xf32, #tpu.memory_space<vmem>>, vector<1x128xf32>
    %43 = arith.truncf %39 : vector<16x128xf32> to vector<16x128xbf16>
    %cst_23 = arith.constant dense<0.000000e+00> : vector<16x128xf32>
    %44 = tpu.matmul %43, %40, %cst_23 {dimension_numbers = #tpu.dot_dimension_numbers<[1], [0], [0], [1], [0, 0, 1, 1], [], []>} : vector<16x128xbf16>, vector<128x128xbf16>, vector<16x128xf32> -> vector<16x128xf32>
    %45 = vector.extract_strided_slice %44 {offsets = [0, 16], sizes = [16, 1], strides = [1, 1]} : vector<16x128xf32> to vector<16x1xf32>
    %46 = arith.truncf %44 : vector<16x128xf32> to vector<16x128xbf16>
    %cst_24 = arith.constant dense<0.000000e+00> : vector<1x16xf32>
    %47 = tpu.matmul %41, %46, %cst_24 {dimension_numbers = #tpu.dot_dimension_numbers<[1], [1], [0], [0], [0, 0, 1, 0], [], []>} : vector<1x128xbf16>, vector<16x128xbf16>, vector<1x16xf32> -> vector<1x16xf32>
    %48 = vector.broadcast %45 : vector<16x1xf32> to vector<16x16xf32>
    %49 = vector.broadcast %47 : vector<1x16xf32> to vector<16x16xf32>
    %50 = arith.addf %48, %49 : vector<16x16xf32>
    %cst_25 = arith.constant 0.000000e+00 : f32
    %51 = vector.broadcast %cst_25 : f32 to vector<16x16xf32>
    %52 = arith.cmpf ogt, %50, %51 : vector<16x16xf32>
    %cst_26 = arith.constant 2.000000e-01 : f32
    %53 = vector.broadcast %cst_26 : f32 to vector<16x16xf32>
    %54 = arith.mulf %53, %50 : vector<16x16xf32>
    %55 = arith.select %52, %50, %54 : vector<16x16xi1>, vector<16x16xf32>
    %56 = arith.addf %55, %1 : vector<16x16xf32>
    %cst_27 = arith.constant dense<0xFF800000> : vector<16xf32>
    %57 = vector.multi_reduction <maximumf>, %56, %cst_27 [1] : vector<16x16xf32> to vector<16xf32>
    %58 = vector.shape_cast %57 : vector<16xf32> to vector<16x1xf32>
    %59 = vector.broadcast %58 : vector<16x1xf32> to vector<16x16xf32>
    %60 = arith.subf %56, %59 : vector<16x16xf32>
    %61 = math.exp %60 : vector<16x16xf32>
    %cst_28 = arith.constant dense<0.000000e+00> : vector<16xf32>
    %62 = vector.multi_reduction <add>, %61, %cst_28 [1] : vector<16x16xf32> to vector<16xf32>
    %63 = vector.shape_cast %62 : vector<16xf32> to vector<16x1xf32>
    %64 = tpu.reciprocal %63 {approx = true} : vector<16x1xf32> -> vector<16x1xf32>
    %65 = vector.broadcast %64 : vector<16x1xf32> to vector<16x16xf32>
    %66 = arith.mulf %61, %65 : vector<16x16xf32>
    %67 = arith.truncf %66 : vector<16x16xf32> to vector<16x16xbf16>
    %68 = arith.truncf %44 : vector<16x128xf32> to vector<16x128xbf16>
    %cst_29 = arith.constant dense<0.000000e+00> : vector<16x128xf32>
    %69 = tpu.matmul %67, %68, %cst_29 {dimension_numbers = #tpu.dot_dimension_numbers<[1], [0], [0], [1], [0, 0, 1, 1], [], []>} : vector<16x16xbf16>, vector<16x128xbf16>, vector<16x128xf32> -> vector<16x128xf32>
    %70 = vector.broadcast %42 : vector<1x128xf32> to vector<16x128xf32>
    %71 = arith.addf %69, %70 : vector<16x128xf32>
    %c0_30 = arith.constant 0 : index
    %c0_31 = arith.constant 0 : index
    %72 = vector.load %arg2[%c0_30, %c0_31] : memref<2x16xbf16, #tpu.memory_space<vmem>>, vector<2x16xbf16>
    %73 = arith.truncf %71 : vector<16x128xf32> to vector<16x128xbf16>
    %cst_32 = arith.constant dense<0.000000e+00> : vector<2x128xf32>
    %74 = tpu.matmul %72, %73, %cst_32 {dimension_numbers = #tpu.dot_dimension_numbers<[1], [0], [0], [1], [0, 0, 1, 1], [], []>} : vector<2x16xbf16>, vector<16x128xbf16>, vector<2x128xf32> -> vector<2x128xf32>
    %c0_33 = arith.constant 0 : index
    %c0_34 = arith.constant 0 : index
    %75 = vector.load %arg9[%c0_33, %c0_34] : memref<2x128xf32, #tpu.memory_space<vmem>>, vector<2x128xf32>
    tpu.vector_store %arg9[%c0_33, %c0_34], %74 {strides = array<i32>} : memref<2x128xf32, #tpu.memory_space<vmem>>, vector<2x128xf32>,
    return
  }
}

</mosaic_0001>

<llo_original>
// kernel: gnn_forward.1
$region0: #{gnn_forward.1}
  #allocation0 [shape = 'u32[]', space=smem, size = 0x4, offset = 0x4, fixed_abs, tag = 'smem constant byte address 0x4 - core index']
  #allocation1 [shape = 'u32[144,128]{1,0:T(1,128)}', space=vmem, size = 0x12000, scoped, tag = 'internal scratch']
  %s0 = inlined_call_operand.vmem [shape: f32[16,16], index: 0, kind: input, shape index: {}]
  %s1 = inlined_call_operand.vmem [shape: bf16[16,16], index: 1, kind: input, shape index: {}]
  %s2 = inlined_call_operand.vmem [shape: bf16[2,16], index: 2, kind: input, shape index: {}]
  %s3 = inlined_call_operand.vmem [shape: bf16[16,128], index: 3, kind: input, shape index: {}]
  %s4 = inlined_call_operand.vmem [shape: bf16[1,128], index: 4, kind: input, shape index: {}]
  %s5 = inlined_call_operand.vmem [shape: f32[1,128], index: 5, kind: input, shape index: {}]
  %s6 = inlined_call_operand.vmem [shape: bf16[128,128], index: 6, kind: input, shape index: {}]
  %s7 = inlined_call_operand.vmem [shape: bf16[1,128], index: 7, kind: input, shape index: {}]
  %s8 = inlined_call_operand.vmem [shape: f32[1,128], index: 8, kind: input, shape index: {}]
  %s9 = inlined_call_operand.hbm [shape: f32[2,128], index: 9, kind: output, shape index: {}]
  %s10 = sld [smem:[#allocation0]]
  $region46: #{gnn_forward.1} parent=0
    _
  %s12 = ssub.s32 1, %s10
  %s13 = scalar_select 0, %s12, %s10
  $region1: #{gnn_forward.1} parent=0
    #allocation2 [shape = 'u8[1024]{0}', space=vmem, size = 0x400, scoped, tag = 'output window, operand 0, single buffered']
    #allocation3 [shape = 's32[1]{0}', space=sflag, size = 0x4, scoped, tag = 'scoped memory for gnn_forward.1']
    %14 = vsyncpa [#allocation3], 0
    // Predicated region
    $region2: #{gnn_forward.1} parent=1 // pred_check
      _
    $region3: #{gnn_forward.1} parent=1 // pred_check_branch
      %16 = sbr.rel (0) target = $region5
    $region4: #{gnn_forward.1} parent=1 // pred_region
      _
    $region5: #{gnn_forward.1} parent=1 // pred_fallthru
      _
    // Predicated region
    $region6: #{gnn_forward.1} parent=1 // pred_check
      _
    $region7: #{gnn_forward.1} parent=1 // pred_check_branch
      %18 = sbr.rel (0) target = $region9
    $region8: #{gnn_forward.1} parent=1 // pred_region
      _
    $region9: #{gnn_forward.1} parent=1 // pred_fallthru
      _
    // Predicated region
    $region10: #{gnn_forward.1} parent=1 // pred_check
      _
    $region11: #{gnn_forward.1} parent=1 // pred_check_branch
      %20 = sbr.rel (0) target = $region13
    $region12: #{gnn_forward.1} parent=1 // pred_region
      _
    $region13: #{gnn_forward.1} parent=1 // pred_fallthru
      _
    // Predicated region
    $region14: #{gnn_forward.1} parent=1 // pred_check
      _
    $region15: #{gnn_forward.1} parent=1 // pred_check_branch
      %22 = sbr.rel (0) target = $region17
    $region16: #{gnn_forward.1} parent=1 // pred_region
      _
    $region17: #{gnn_forward.1} parent=1 // pred_fallthru
      _
    // Predicated region
    $region18: #{gnn_forward.1} parent=1 // pred_check
      _
    $region19: #{gnn_forward.1} parent=1 // pred_check_branch
      %24 = sbr.rel (0) target = $region21
    $region20: #{gnn_forward.1} parent=1 // pred_region
      _
    $region21: #{gnn_forward.1} parent=1 // pred_fallthru
      _
    // Predicated region
    $region22: #{gnn_forward.1} parent=1 // pred_check
      _
    $region23: #{gnn_forward.1} parent=1 // pred_check_branch
      %26 = sbr.rel (0) target = $region25
    $region24: #{gnn_forward.1} parent=1 // pred_region
      _
    $region25: #{gnn_forward.1} parent=1 // pred_fallthru
      _
    // Predicated region
    $region26: #{gnn_forward.1} parent=1 // pred_check
      _
    $region27: #{gnn_forward.1} parent=1 // pred_check_branch
      %28 = sbr.rel (0) target = $region29
    $region28: #{gnn_forward.1} parent=1 // pred_region
      _
    $region29: #{gnn_forward.1} parent=1 // pred_fallthru
      _
    // Predicated region
    $region30: #{gnn_forward.1} parent=1 // pred_check
      _
    $region31: #{gnn_forward.1} parent=1 // pred_check_branch
      %30 = sbr.rel (0) target = $region33
    $region32: #{gnn_forward.1} parent=1 // pred_region
      _
    $region33: #{gnn_forward.1} parent=1 // pred_fallthru
      _
    // Predicated region
    $region34: #{gnn_forward.1} parent=1 // pred_check
      _
    $region35: #{gnn_forward.1} parent=1 // pred_check_branch
      %32 = sbr.rel (0) target = $region37
    $region36: #{gnn_forward.1} parent=1 // pred_region
      _
    $region37: #{gnn_forward.1} parent=1 // pred_fallthru
      _
    %v34 = vld [vmem:[%s1] sm:$0xf]
    %v35 = vld [vmem:[%s1 + $0x4] sm:$0xf]
    %v36 = vunpack.c.l.bf16 %v34
    %v37 = vunpack.c.l.bf16 %v35
    %v38 = vld [vmem:[%s0] sm:$0xff]
    %v39 = vld [vmem:[%s0 + $0x8] sm:$0xff]
    %v40 = vld [vmem:[%s3] sm:$0xf]
    %v41 = vld [vmem:[%s3 + $0x4] sm:$0xf]
    %v42 = vld [vmem:[%s4] sm:$0x1]
    %v43 = vld [vmem:[%s5] sm:$0x1]
    %v44 = vpack.c.bf16 %v39, %v38
    %v47 = vunpack.c.l.b16 %v40
    %v48 = vunpack.c.l.b16 %v41
    %v49 = vpack.c.b16 %v48, %v47
    %vm51 = vcmask 130048
    %v53 = vsel %vm51, %v44, 0
    %55 = vmatprep.subr.bf16.mxu0 0
    %56 = vmatpush1.bf16.msra.mxu0 0
    %57 = vmatprep.subr.bf16.mxu0 0
    %58 = vmatpush1.bf16.msra.mxu0 0
    %59 = vmatprep.subr.bf16.mxu0 0
    %60 = vmatpush1.bf16.msra.mxu0 0
    %61 = vmatprep.subr.bf16.mxu0 0
    %62 = vmatpush1.bf16.msra.mxu0 0
    %63 = vmatprep.subr.bf16.mxu0 0
    %64 = vmatpush1.bf16.msra.mxu0 0
    %65 = vmatprep.subr.bf16.mxu0 0
    %66 = vmatpush1.bf16.msra.mxu0 0
    %67 = vmatprep.subr.bf16.mxu0 0
    %68 = vmatpush1.bf16.msra.mxu0 0
    %69 = vmatprep.subr.bf16.mxu0 0
    %70 = vmatpush1.bf16.msra.mxu0 %v49
    %71 = vmatprep.subr.bf16.mxu0 0
    %72 = vmatpush2.bf16.msra.mxu0 0
    %73 = vmatprep.subr.bf16.mxu0 0
    %74 = vmatpush2.bf16.msra.mxu0 0
    %75 = vmatprep.subr.bf16.mxu0 0
    %76 = vmatpush2.bf16.msra.mxu0 0
    %77 = vmatprep.subr.bf16.mxu0 0
    %78 = vmatpush2.bf16.msra.mxu0 0
    %79 = vmatprep.subr.bf16.mxu0 0
    %80 = vmatpush2.bf16.msra.mxu0 0
    %81 = vmatprep.subr.bf16.mxu0 0
    %82 = vmatpush2.bf16.msra.mxu0 0
    %83 = vmatprep.subr.bf16.mxu0 0
    %84 = vmatpush2.bf16.msra.mxu0 0
    %85 = vmatprep.subr.bf16.mxu0 0
    %86 = vmatpush2.bf16.msra.mxu0 0
    %87 = vmatprep.mubr.bf16.mxu0 0
    %88 = vmatmul.mubr.bf16.gmra.mxu0 %v53
    %v89 = vpop.f32.mrf.mxu0
    %v90 = vadd.f32 0.0, %v89
    %v91 = vpop.f32.mrf.mxu0
    %v92 = vpop.f32.mrf.mxu0
    %v93 = vadd.f32 0.0, %v92
    %v94 = vpop.f32.mrf.mxu0
    %95 = vdwg.mxu0
    %v96 = vpack.c.bf16 %v93, %v90
    %97 = vmatprep.subr.bf16.mxu0 0
    %98 = vmatpush1.bf16.xpose.msra.mxu0 0
    %99 = vmatprep.subr.bf16.mxu0 0
    %100 = vmatpush1.bf16.xpose.msra.mxu0 0
    %101 = vmatprep.subr.bf16.mxu0 0
    %102 = vmatpush1.bf16.xpose.msra.mxu0 0
    %103 = vmatprep.subr.bf16.mxu0 0
    %104 = vmatpush1.bf16.xpose.msra.mxu0 0
    %105 = vmatprep.subr.bf16.mxu0 0
    %106 = vmatpush1.bf16.xpose.msra.mxu0 0
    %107 = vmatprep.subr.bf16.mxu0 0
    %108 = vmatpush1.bf16.xpose.msra.mxu0 0
    %109 = vmatprep.subr.bf16.mxu0 0
    %110 = vmatpush1.bf16.xpose.msra.mxu0 0
    %111 = vmatprep.subr.bf16.mxu0 0
    %112 = vmatpush1.bf16.xpose.msra.mxu0 %v96
    %113 = vmatprep.subr.bf16.mxu0 0
    %114 = vmatpush2.bf16.xpose.msra.mxu0 0
    %115 = vmatprep.subr.bf16.mxu0 0
    %116 = vmatpush2.bf16.xpose.msra.mxu0 0
    %117 = vmatprep.subr.bf16.mxu0 0
    %118 = vmatpush2.bf16.xpose.msra.mxu0 0
    %119 = vmatprep.subr.bf16.mxu0 0
    %120 = vmatpush2.bf16.xpose.msra.mxu0 0
    %121 = vmatprep.subr.bf16.mxu0 0
    %122 = vmatpush2.bf16.xpose.msra.mxu0 0
    %123 = vmatprep.subr.bf16.mxu0 0
    %124 = vmatpush2.bf16.xpose.msra.mxu0 0
    %125 = vmatprep.subr.bf16.mxu0 0
    %126 = vmatpush2.bf16.xpose.msra.mxu0 0
    %127 = vmatprep.subr.bf16.mxu0 0
    %128 = vmatpush2.bf16.xpose.msra.mxu0 0
    %129 = vmatprep.mubr.bf16.mxu0 0
    %130 = vmatmul.mubr.bf16.gmra.mxu0 %v42
    %v131 = vpop.f32.mrf.mxu0
    %v132 = vadd.f32 0.0, %v131
    %v133 = vpop.f32.mrf.mxu0
    %v134 = vpop.f32.mrf.mxu0
    %v135 = vpop.f32.mrf.mxu0
    %136 = vdwg.mxu0
    %138 = vset.pattern.permute.xlu0 32
    %139 = vperm.xlu0 %138, %v90
    %v140 = vpop.permute.xlu0 %139
    %143 = vset.pattern.permute.xlu0 32
    %144 = vperm.xlu0 %143, %v93
    %v145 = vpop.permute.xlu0 %144
    %v147 = vlaneseq
    %v148 = vshrl.u32 %v147, 7
    %v149 = vsub.s32 0, %v148
    %v150 = vrot.slane %v132, %v149
    %v151 = vadd.f32 %v140, %v150
    %v152 = vadd.f32 %v145, %v150
    %vm153 = vcmp.gt.f32.partialorder %v151, 0.0
    %vm154 = vcmp.gt.f32.partialorder %v152, 0.0
    %v155 = vmul.f32 %v151, 0.2
    %v156 = vmul.f32 %v152, 0.2
    %v157 = vsel %vm153, %v151, %v155
    %v158 = vsel %vm154, %v152, %v156
    %v159 = vadd.f32 %v157, %v36
    %v160 = vadd.f32 %v158, %v37
    %v161 = vsel %vm51, %v159, -inf
    %162 = vmax.xlane.f32.xlu0 %v161
    %v163 = vpop.xlane.xlu0 %162
    %v164 = vsel %vm51, %v160, -inf
    %165 = vmax.xlane.f32.xlu0 %v164
    %v166 = vpop.xlane.xlu0 %165
    %v167 = vsub.f32 %v159, %v163
    %v168 = vsub.f32 %v160, %v166
    %v169 = vmul.f32 %v167, 1.442695
    %v170 = vpow.pop %v169
    %v171 = vmul.f32 %v168, 1.442695
    %v172 = vpow.pop %v171
    %v173 = vsel %vm51, %v170, 0.0
    %174 = vadd.xlane.f32.xlu0 %v173
    %v175 = vpop.xlane.xlu0 %174
    %v176 = vsel %vm51, %v172, 0.0
    %177 = vadd.xlane.f32.xlu0 %v176
    %v178 = vpop.xlane.xlu0 %177
    %v179 = vrcp.pop %v175
    %v180 = vrcp.pop %v178
    %v181 = vmul.f32 %v170, %v179
    %v182 = vmul.f32 %v172, %v180
    %v183 = vpack.c.bf16 %v182, %v181
    %v185 = vlaneseq
    %v186 = vshrl.u32 %v185, 7
    %v187 = vsub.s32 0, %v186
    %v188 = vrot.slane %v43, %v187
    %v191 = vsel %vm51, %v183, 0
    %193 = vmatprep.subr.bf16.mxu0 0
    %194 = vmatpush1.bf16.msra.mxu0 0
    %195 = vmatprep.subr.bf16.mxu0 0
    %196 = vmatpush1.bf16.msra.mxu0 0
    %197 = vmatprep.subr.bf16.mxu0 0
    %198 = vmatpush1.bf16.msra.mxu0 0
    %199 = vmatprep.subr.bf16.mxu0 0
    %200 = vmatpush1.bf16.msra.mxu0 0
    %201 = vmatprep.subr.bf16.mxu0 0
    %202 = vmatpush1.bf16.msra.mxu0 0
    %203 = vmatprep.subr.bf16.mxu0 0
    %204 = vmatpush1.bf16.msra.mxu0 0
    %205 = vmatprep.subr.bf16.mxu0 0
    %206 = vmatpush1.bf16.msra.mxu0 0
    %207 = vmatprep.subr.bf16.mxu0 0
    %208 = vmatpush1.bf16.msra.mxu0 %v96
    %209 = vmatprep.subr.bf16.mxu0 0
    %210 = vmatpush2.bf16.msra.mxu0 0
    %211 = vmatprep.subr.bf16.mxu0 0
    %212 = vmatpush2.bf16.msra.mxu0 0
    %213 = vmatprep.subr.bf16.mxu0 0
    %214 = vmatpush2.bf16.msra.mxu0 0
    %215 = vmatprep.subr.bf16.mxu0 0
    %216 = vmatpush2.bf16.msra.mxu0 0
    %217 = vmatprep.subr.bf16.mxu0 0
    %218 = vmatpush2.bf16.msra.mxu0 0
    %219 = vmatprep.subr.bf16.mxu0 0
    %220 = vmatpush2.bf16.msra.mxu0 0
    %221 = vmatprep.subr.bf16.mxu0 0
    %222 = vmatpush2.bf16.msra.mxu0 0
    %223 = vmatprep.subr.bf16.mxu0 0
    %224 = vmatpush2.bf16.msra.mxu0 0
    %225 = vmatprep.mubr.bf16.mxu0 0
    %226 = vmatmul.mubr.bf16.gmra.mxu0 %v191
    %v227 = vpop.f32.mrf.mxu0
    %v228 = vadd.f32 %v188, %v227
    %v229 = vpop.f32.mrf.mxu0
    %v230 = vpop.f32.mrf.mxu0
    %v231 = vadd.f32 %v188, %v230
    %v232 = vpop.f32.mrf.mxu0
    %233 = vdwg.mxu0
    %vm234 = vcmp.gt.f32.partialorder %v228, 0.0
    %vm235 = vcmp.gt.f32.partialorder %v231, 0.0
    %v236 = vmul.f32 %v228, 0.01
    %v237 = vmul.f32 %v231, 0.01
    %v238 = vsel %vm234, %v228, %v236
    %v239 = vsel %vm235, %v231, %v237
    %v240 = vld [vmem:[%s6] sm:$0xf]
    %v241 = vld [vmem:[%s6 + $0x4] sm:$0xf]
    %v242 = vld [vmem:[%s6 + $0x8] sm:$0xf]
    %v243 = vld [vmem:[%s6 + $0xc] sm:$0xf]
    %v244 = vld [vmem:[%s6 + $0x10] sm:$0xf]
    %v245 = vld [vmem:[%s6 + $0x14] sm:$0xf]
    %v246 = vld [vmem:[%s6 + $0x18] sm:$0xf]
    %v247 = vld [vmem:[%s6 + $0x1c] sm:$0xf]
    %v248 = vld [vmem:[%s6 + $0x20] sm:$0xf]
    %v249 = vld [vmem:[%s6 + $0x24] sm:$0xf]
    %v250 = vld [vmem:[%s6 + $0x28] sm:$0xf]
    %v251 = vld [vmem:[%s6 + $0x2c] sm:$0xf]
    %v252 = vld [vmem:[%s6 + $0x30] sm:$0xf]
    %v253 = vld [vmem:[%s6 + $0x34] sm:$0xf]
    %v254 = vld [vmem:[%s6 + $0x38] sm:$0xf]
    %v255 = vld [vmem:[%s6 + $0x3c] sm:$0xf]
    %v256 = vld [vmem:[%s7] sm:$0x1]
    %v257 = vld [vmem:[%s8] sm:$0x1]
    %v258 = vpack.c.bf16 %v239, %v238
    %v275 = vunpack.c.l.b16 %v240
    %v276 = vunpack.c.l.b16 %v241
    %v277 = vunpack.c.l.b16 %v242
    %v278 = vunpack.c.l.b16 %v243
    %v279 = vunpack.c.l.b16 %v244
    %v280 = vunpack.c.l.b16 %v245
    %v281 = vunpack.c.l.b16 %v246
    %v282 = vunpack.c.l.b16 %v247
    %v283 = vunpack.c.l.b16 %v248
    %v284 = vunpack.c.l.b16 %v249
    %v285 = vunpack.c.l.b16 %v250
    %v286 = vunpack.c.l.b16 %v251
    %v287 = vunpack.c.l.b16 %v252
    %v288 = vunpack.c.l.b16 %v253
    %v289 = vunpack.c.l.b16 %v254
    %v290 = vunpack.c.l.b16 %v255
    %v291 = vpack.c.b16 %v276, %v275
    %v292 = vpack.c.b16 %v278, %v277
    %v293 = vpack.c.b16 %v280, %v279
    %v294 = vpack.c.b16 %v282, %v281
    %v295 = vpack.c.b16 %v284, %v283
    %v296 = vpack.c.b16 %v286, %v285
    %v297 = vpack.c.b16 %v288, %v287
    %v298 = vpack.c.b16 %v290, %v289
    %307 = vmatprep.subr.bf16.mxu0 0
    %308 = vmatpush1.bf16.msra.mxu0 %v298
    %309 = vmatprep.subr.bf16.mxu0 0
    %310 = vmatpush1.bf16.msra.mxu0 %v297
    %311 = vmatprep.subr.bf16.mxu0 0
    %312 = vmatpush1.bf16.msra.mxu0 %v296
    %313 = vmatprep.subr.bf16.mxu0 0
    %314 = vmatpush1.bf16.msra.mxu0 %v295
    %315 = vmatprep.subr.bf16.mxu0 0
    %316 = vmatpush1.bf16.msra.mxu0 %v294
    %317 = vmatprep.subr.bf16.mxu0 0
    %318 = vmatpush1.bf16.msra.mxu0 %v293
    %319 = vmatprep.subr.bf16.mxu0 0
    %320 = vmatpush1.bf16.msra.mxu0 %v292
    %321 = vmatprep.subr.bf16.mxu0 0
    %322 = vmatpush1.bf16.msra.mxu0 %v291
    %323 = vmatprep.subr.bf16.mxu0 0
    %324 = vmatpush2.bf16.msra.mxu0 0
    %325 = vmatprep.subr.bf16.mxu0 0
    %326 = vmatpush2.bf16.msra.mxu0 0
    %327 = vmatprep.subr.bf16.mxu0 0
    %328 = vmatpush2.bf16.msra.mxu0 0
    %329 = vmatprep.subr.bf16.mxu0 0
    %330 = vmatpush2.bf16.msra.mxu0 0
    %331 = vmatprep.subr.bf16.mxu0 0
    %332 = vmatpush2.bf16.msra.mxu0 0
    %333 = vmatprep.subr.bf16.mxu0 0
    %334 = vmatpush2.bf16.msra.mxu0 0
    %335 = vmatprep.subr.bf16.mxu0 0
    %336 = vmatpush2.bf16.msra.mxu0 0
    %337 = vmatprep.subr.bf16.mxu0 0
    %338 = vmatpush2.bf16.msra.mxu0 0
    %339 = vmatprep.mubr.bf16.mxu0 0
    %340 = vmatmul.mubr.bf16.gmra.mxu0 %v258
    %v341 = vpop.f32.mrf.mxu0
    %v342 = vadd.f32 0.0, %v341
    %v343 = vpop.f32.mrf.mxu0
    %v344 = vpop.f32.mrf.mxu0
    %v345 = vadd.f32 0.0, %v344
    %v346 = vpop.f32.mrf.mxu0
    %347 = vdwg.mxu0
    %v348 = vpack.c.bf16 %v345, %v342
    %349 = vmatprep.subr.bf16.mxu0 0
    %350 = vmatpush1.bf16.xpose.msra.mxu0 0
    %351 = vmatprep.subr.bf16.mxu0 0
    %352 = vmatpush1.bf16.xpose.msra.mxu0 0
    %353 = vmatprep.subr.bf16.mxu0 0
    %354 = vmatpush1.bf16.xpose.msra.mxu0 0
    %355 = vmatprep.subr.bf16.mxu0 0
    %356 = vmatpush1.bf16.xpose.msra.mxu0 0
    %357 = vmatprep.subr.bf16.mxu0 0
    %358 = vmatpush1.bf16.xpose.msra.mxu0 0
    %359 = vmatprep.subr.bf16.mxu0 0
    %360 = vmatpush1.bf16.xpose.msra.mxu0 0
    %361 = vmatprep.subr.bf16.mxu0 0
    %362 = vmatpush1.bf16.xpose.msra.mxu0 0
    %363 = vmatprep.subr.bf16.mxu0 0
    %364 = vmatpush1.bf16.xpose.msra.mxu0 %v348
    %365 = vmatprep.subr.bf16.mxu0 0
    %366 = vmatpush2.bf16.xpose.msra.mxu0 0
    %367 = vmatprep.subr.bf16.mxu0 0
    %368 = vmatpush2.bf16.xpose.msra.mxu0 0
    %369 = vmatprep.subr.bf16.mxu0 0
    %370 = vmatpush2.bf16.xpose.msra.mxu0 0
    %371 = vmatprep.subr.bf16.mxu0 0
    %372 = vmatpush2.bf16.xpose.msra.mxu0 0
    %373 = vmatprep.subr.bf16.mxu0 0
    %374 = vmatpush2.bf16.xpose.msra.mxu0 0
    %375 = vmatprep.subr.bf16.mxu0 0
    %376 = vmatpush2.bf16.xpose.msra.mxu0 0
    %377 = vmatprep.subr.bf16.mxu0 0
    %378 = vmatpush2.bf16.xpose.msra.mxu0 0
    %379 = vmatprep.subr.bf16.mxu0 0
    %380 = vmatpush2.bf16.xpose.msra.mxu0 0
    %381 = vmatprep.mubr.bf16.mxu0 0
    %382 = vmatmul.mubr.bf16.gmra.mxu0 %v256
    %v383 = vpop.f32.mrf.mxu0
    %v384 = vadd.f32 0.0, %v383
    %v385 = vpop.f32.mrf.mxu0
    %v386 = vpop.f32.mrf.mxu0
    %v387 = vpop.f32.mrf.mxu0
    %388 = vdwg.mxu0
    %390 = vset.pattern.permute.xlu0 16
    %391 = vperm.xlu0 %390, %v342
    %v392 = vpop.permute.xlu0 %391
    %395 = vset.pattern.permute.xlu0 16
    %396 = vperm.xlu0 %395, %v345
    %v397 = vpop.permute.xlu0 %396
    %v399 = vlaneseq
    %v400 = vshrl.u32 %v399, 7
    %v401 = vsub.s32 0, %v400
    %v402 = vrot.slane %v384, %v401
    %v403 = vadd.f32 %v392, %v402
    %v404 = vadd.f32 %v397, %v402
    %vm405 = vcmp.gt.f32.partialorder %v403, 0.0
    %vm406 = vcmp.gt.f32.partialorder %v404, 0.0
    %v407 = vmul.f32 %v403, 0.2
    %v408 = vmul.f32 %v404, 0.2
    %v409 = vsel %vm405, %v403, %v407
    %v410 = vsel %vm406, %v404, %v408
    %v411 = vadd.f32 %v409, %v36
    %v412 = vadd.f32 %v410, %v37
    %v413 = vsel %vm51, %v411, -inf
    %414 = vmax.xlane.f32.xlu0 %v413
    %v415 = vpop.xlane.xlu0 %414
    %v416 = vsel %vm51, %v412, -inf
    %417 = vmax.xlane.f32.xlu0 %v416
    %v418 = vpop.xlane.xlu0 %417
    %v419 = vsub.f32 %v411, %v415
    %v420 = vsub.f32 %v412, %v418
    %v421 = vmul.f32 %v419, 1.442695
    %v422 = vpow.pop %v421
    %v423 = vmul.f32 %v420, 1.442695
    %v424 = vpow.pop %v423
    %v425 = vsel %vm51, %v422, 0.0
    %426 = vadd.xlane.f32.xlu0 %v425
    %v427 = vpop.xlane.xlu0 %426
    %v428 = vsel %vm51, %v424, 0.0
    %429 = vadd.xlane.f32.xlu0 %v428
    %v430 = vpop.xlane.xlu0 %429
    %v431 = vrcp.pop %v427
    %v432 = vrcp.pop %v430
    %v433 = vmul.f32 %v422, %v431
    %v434 = vmul.f32 %v424, %v432
    %v435 = vpack.c.bf16 %v434, %v433
    %v437 = vlaneseq
    %v438 = vshrl.u32 %v437, 7
    %v439 = vsub.s32 0, %v438
    %v440 = vrot.slane %v257, %v439
    %v443 = vsel %vm51, %v435, 0
    %445 = vmatprep.subr.bf16.mxu0 0
    %446 = vmatpush1.bf16.msra.mxu0 0
    %447 = vmatprep.subr.bf16.mxu0 0
    %448 = vmatpush1.bf16.msra.mxu0 0
    %449 = vmatprep.subr.bf16.mxu0 0
    %450 = vmatpush1.bf16.msra.mxu0 0
    %451 = vmatprep.subr.bf16.mxu0 0
    %452 = vmatpush1.bf16.msra.mxu0 0
    %453 = vmatprep.subr.bf16.mxu0 0
    %454 = vmatpush1.bf16.msra.mxu0 0
    %455 = vmatprep.subr.bf16.mxu0 0
    %456 = vmatpush1.bf16.msra.mxu0 0
    %457 = vmatprep.subr.bf16.mxu0 0
    %458 = vmatpush1.bf16.msra.mxu0 0
    %459 = vmatprep.subr.bf16.mxu0 0
    %460 = vmatpush1.bf16.msra.mxu0 %v348
    %461 = vmatprep.subr.bf16.mxu0 0
    %462 = vmatpush2.bf16.msra.mxu0 0
    %463 = vmatprep.subr.bf16.mxu0 0
    %464 = vmatpush2.bf16.msra.mxu0 0
    %465 = vmatprep.subr.bf16.mxu0 0
    %466 = vmatpush2.bf16.msra.mxu0 0
    %467 = vmatprep.subr.bf16.mxu0 0
    %468 = vmatpush2.bf16.msra.mxu0 0
    %469 = vmatprep.subr.bf16.mxu0 0
    %470 = vmatpush2.bf16.msra.mxu0 0
    %471 = vmatprep.subr.bf16.mxu0 0
    %472 = vmatpush2.bf16.msra.mxu0 0
    %473 = vmatprep.subr.bf16.mxu0 0
    %474 = vmatpush2.bf16.msra.mxu0 0
    %475 = vmatprep.subr.bf16.mxu0 0
    %476 = vmatpush2.bf16.msra.mxu0 0
    %477 = vmatprep.mubr.bf16.mxu0 0
    %478 = vmatmul.mubr.bf16.gmra.mxu0 %v443
    %v479 = vpop.f32.mrf.mxu0
    %v480 = vadd.f32 %v440, %v479
    %v481 = vpop.f32.mrf.mxu0
    %v482 = vpop.f32.mrf.mxu0
    %v483 = vadd.f32 %v440, %v482
    %v484 = vpop.f32.mrf.mxu0
    %485 = vdwg.mxu0
    %v486 = vld [vmem:[%s2] sm:$0x1]
    %v487 = vpack.c.bf16 %v483, %v480
    %v489 = vsel %vm51, %v486, 0
    %491 = vmatprep.subr.bf16.mxu0 0
    %492 = vmatpush1.bf16.msra.mxu0 0
    %493 = vmatprep.subr.bf16.mxu0 0
    %494 = vmatpush1.bf16.msra.mxu0 0
    %495 = vmatprep.subr.bf16.mxu0 0
    %496 = vmatpush1.bf16.msra.mxu0 0
    %497 = vmatprep.subr.bf16.mxu0 0
    %498 = vmatpush1.bf16.msra.mxu0 0
    %499 = vmatprep.subr.bf16.mxu0 0
    %500 = vmatpush1.bf16.msra.mxu0 0
    %501 = vmatprep.subr.bf16.mxu0 0
    %502 = vmatpush1.bf16.msra.mxu0 0
    %503 = vmatprep.subr.bf16.mxu0 0
    %504 = vmatpush1.bf16.msra.mxu0 0
    %505 = vmatprep.subr.bf16.mxu0 0
    %506 = vmatpush1.bf16.msra.mxu0 %v487
    %507 = vmatprep.subr.bf16.mxu0 0
    %508 = vmatpush2.bf16.msra.mxu0 0
    %509 = vmatprep.subr.bf16.mxu0 0
    %510 = vmatpush2.bf16.msra.mxu0 0
    %511 = vmatprep.subr.bf16.mxu0 0
    %512 = vmatpush2.bf16.msra.mxu0 0
    %513 = vmatprep.subr.bf16.mxu0 0
    %514 = vmatpush2.bf16.msra.mxu0 0
    %515 = vmatprep.subr.bf16.mxu0 0
    %516 = vmatpush2.bf16.msra.mxu0 0
    %517 = vmatprep.subr.bf16.mxu0 0
    %518 = vmatpush2.bf16.msra.mxu0 0
    %519 = vmatprep.subr.bf16.mxu0 0
    %520 = vmatpush2.bf16.msra.mxu0 0
    %521 = vmatprep.subr.bf16.mxu0 0
    %522 = vmatpush2.bf16.msra.mxu0 0
    %523 = vmatprep.mubr.bf16.mxu0 0
    %524 = vmatmul.mubr.bf16.gmra.mxu0 %v489
    %v525 = vpop.f32.mrf.mxu0
    %v526 = vadd.f32 0.0, %v525
    %v527 = vpop.f32.mrf.mxu0
    %v528 = vpop.f32.mrf.mxu0
    %v529 = vpop.f32.mrf.mxu0
    %530 = vdwg.mxu0
    %531 = vst [vmem:[#allocation2] sm:$0x3] %v526
    // Predicated region
    $region38: #{gnn_forward.1} parent=1 // pred_check
      _
    $region39: #{gnn_forward.1} parent=1 // pred_check_branch
      %533 = sbr.rel (0) target = $region41
    $region40: #{gnn_forward.1} parent=1 // pred_region
      %s535 = ssub.s32 32, 32
      %536 = vsyncadd [#allocation3], %s535
      %s538 = sshll.u32 [#allocation2], 4
      %s539 = int_to_ptr.vmem [resolvable:$true] %s538
      %541 = dma.vmem_to_hbm [thread:$0]  %s539, 32, %s9, [#allocation3]
    $region41: #{gnn_forward.1} parent=1 // pred_fallthru
      _
    // Predicated region
    $region42: #{gnn_forward.1} parent=1 // pred_check
      _
    $region43: #{gnn_forward.1} parent=1 // pred_check_branch
      %543 = sbr.rel (0) target = $region45
    $region44: #{gnn_forward.1} parent=1 // pred_region
      %544 = dma.done [#allocation3], 32
    $region45: #{gnn_forward.1} parent=1 // pred_fallthru
      _
    %545 = vsyncpa [#allocation3], 1

</llo_original>
